<compile_context>
chip_gen: v7x
topology: tpu7x:2x2x1
jax: 0.10.0
libtpu: 0.0.40
codegen_flags: <defaults>
</compile_context>

<pallas_src>
import jax
import jax.numpy as jnp
from jax.experimental import pallas as pl
from jax.experimental.pallas import tpu as pltpu

LANE = 128


def _round_up(x, m):
    return ((x + m - 1) // m) * m


def make_deepfm_kernel(num_hidden_layers):
    def kernel(fo_ref, so_ref, xv_ref, bias_ref, *refs):
        # refs = (wT0, b0, wT1, b1, ..., preds_ref)
        param_refs = refs[:-1]
        preds_ref = refs[-1]

        fo = fo_ref[...]                  # (F, TB)
        so = so_ref[...]                  # (F, E, TB)
        xv = xv_ref[...]                  # (F, TB)

        # ---- FM first order: emb_i(Xi)[...,0] * Xv   -> (F, TB)
        first_order = fo * xv

        # ---- FM second order: 0.5 * ((sum_f v_f)^2 - sum_f v_f^2) -> (E, TB)
        so_w = so * xv[:, None, :]                     # (F, E, TB)
        sum_so = jnp.sum(so_w, axis=0)                 # (E, TB)
        sq_sum_so = jnp.sum(so_w * so_w, axis=0)       # (E, TB)
        second_order = 0.5 * (sum_so * sum_so - sq_sum_so)

        # ---- forward_fm: sum(first) + sum(second) + bias  -> (1, TB)
        fm = (jnp.sum(first_order, axis=0, keepdims=True)
              + jnp.sum(second_order, axis=0, keepdims=True)
              + bias_ref[0])

        # ---- online MLP heads, batch stays on the lane axis
        x = second_order                               # (E, TB)
        for layer in range(num_hidden_layers):
            wT = param_refs[2 * layer][...]            # (H, K)
            b = param_refs[2 * layer + 1][...]         # (H, 1)
            x = jnp.maximum(
                jnp.dot(wT, x, preferred_element_type=jnp.float32) + b, 0.0)  # (H, TB)
            pred = jax.nn.sigmoid(fm + jnp.sum(x, axis=0, keepdims=True))     # (1, TB)
            preds_ref[layer:layer + 1, :] = pred       # lane-dense row store

    return kernel


def deepfm_onn_forward(fo_emb, so_emb, xv, bias, weights, biases,
                       *, max_batch_tile=512):
    """DeepFMOnn forward. Returns (last_pred (B,), pred_per_layer (L, B)).

    fo_emb : (B, F)   first-order embedding lookups
    so_emb : (B, F, E) second-order embedding lookups
    xv     : (B, F)   feature values
    bias   : (1,)
    weights[l] : (in_l, H),  biases[l] : (H,)
    """
    B, F = fo_emb.shape
    E = so_emb.shape[-1]
    L = len(weights)
    H = weights[0].shape[1]

    # ---- batch-in-lanes relayout (batch on the last / lane axis) ----
    fo_t = fo_emb.T.astype(jnp.float32)                       # (F, B)
    xv_t = xv.T.astype(jnp.float32)                           # (F, B)
    so_t = jnp.transpose(so_emb, (1, 2, 0)).astype(jnp.float32)  # (F, E, B)

    # ---- pick a lane-aligned batch tile; pad B up to a multiple of it ----
    B_pad = _round_up(B, LANE)
    tb = LANE
    cand = LANE
    cap = min(max_batch_tile, B_pad)
    while cand <= cap:
        if B_pad % cand == 0:
            tb = cand
        cand += LANE
    pad = B_pad - B
    if pad:
        fo_t = jnp.pad(fo_t, ((0, 0), (0, pad)))
        xv_t = jnp.pad(xv_t, ((0, 0), (0, pad)))
        so_t = jnp.pad(so_t, ((0, 0), (0, 0), (0, pad)))
    n_blk = B_pad // tb

    # ---- weights transposed so the kernel computes w @ x (batch on lanes) ----
    wT = [w.T.astype(jnp.float32) for w in weights]            # (H, K)
    b2 = [b.reshape(-1, 1).astype(jnp.float32) for b in biases]  # (H, 1)

    kernel = make_deepfm_kernel(L)

    in_specs = [
        pl.BlockSpec((F, tb), lambda i: (0, i)),
        pl.BlockSpec((F, E, tb), lambda i: (0, 0, i)),
        pl.BlockSpec((F, tb), lambda i: (0, i)),
        pl.BlockSpec(memory_space=pltpu.MemorySpace.SMEM),     # bias scalar
    ]
    for w_p, b_p in zip(wT, b2):
        in_specs.append(pl.BlockSpec(w_p.shape, lambda i: (0, 0)))
        in_specs.append(pl.BlockSpec(b_p.shape, lambda i: (0, 0)))

    out_specs = pl.BlockSpec((L, tb), lambda i: (0, i))

    preds_pad = pl.pallas_call(
        kernel,
        out_shape=jax.ShapeDtypeStruct((L, B_pad), jnp.float32),
        grid=(n_blk,),
        in_specs=in_specs,
        out_specs=out_specs,
        compiler_params=pltpu.CompilerParams(
            dimension_semantics=("parallel",)),
    )(fo_t, so_t, xv_t, bias.astype(jnp.float32),
      *[p for pair in zip(wT, b2) for p in pair])

    pred_per_layer = preds_pad[:, :B]                          # (L, B)
    return pred_per_layer[-1], pred_per_layer


def reference_forward(fo_emb, so_emb, xv, bias, weights, biases):
    """Pure-JAX reference mirroring the PyTorch module semantics."""
    first_order = fo_emb * xv                                  # (B, F)
    so_w = so_emb * xv[:, :, None]                             # (B, F, E)
    sum_so = jnp.sum(so_w, axis=1)
    second_order = 0.5 * (sum_so * sum_so - jnp.sum(so_w * so_w, axis=1))
    fm = jnp.sum(first_order, 1) + jnp.sum(second_order, 1) + bias[0]
    x = second_order
    preds = []
    for w, b in zip(weights, biases):
        x = jax.nn.relu(x @ w + b)
        preds.append(jax.nn.sigmoid(fm + jnp.sum(x, 1)))
    preds = jnp.stack(preds)
    return preds[-1], preds


def _build_inputs(keys, feature_sizes, fo_tables, so_tables, batch):
    field_size = len(feature_sizes)
    Xi = jnp.stack(
        [jax.random.randint(jax.random.fold_in(keys[5], 1000 * batch + i),
                            (batch,), 0, fs)
         for i, fs in enumerate(feature_sizes)], axis=1)                   # (B, F)
    Xv = jax.random.uniform(jax.random.fold_in(keys[6], batch),
                            (batch, field_size), dtype=jnp.float32)
    # glue: ragged per-field embedding gathers (plain JAX)
    fo_emb = jnp.stack([fo_tables[i][Xi[:, i], 0] for i in range(field_size)],
                       axis=1)                                             # (B, F)
    so_emb = jnp.stack([so_tables[i][Xi[:, i]] for i in range(field_size)],
                       axis=1)                                             # (B, F, E)
    return fo_emb, so_emb, Xv


if __name__ == "__main__":
    # ---- configuration (matches module defaults) ----
    feature_sizes = [10, 20, 30, 15, 25, 12, 18, 22]   # field_size = 8
    field_size = len(feature_sizes)
    embedding_size = 4
    num_hidden_layers = 2
    neuron_per_hidden_layer = 32

    key = jax.random.PRNGKey(0)
    keys = jax.random.split(key, 16)

    # ---- deterministic synthetic parameters (shapes match nn.Module __init__) ----
    bias = jax.random.uniform(keys[0], (1,), dtype=jnp.float32)            # torch.rand(1)

    fo_tables = [jax.random.normal(jax.random.fold_in(keys[1], i),
                                   (fs, 1), dtype=jnp.float32)             # nn.Embedding(fs, 1)
                 for i, fs in enumerate(feature_sizes)]
    so_tables = [jax.random.normal(jax.random.fold_in(keys[2], i),
                                   (fs, embedding_size), dtype=jnp.float32)  # nn.Embedding(fs, E)
                 for i, fs in enumerate(feature_sizes)]

    weights, biases = [], []
    fan_in = embedding_size
    for l in range(num_hidden_layers):
        bound = 1.0 / float(jnp.sqrt(fan_in))
        w = jax.random.uniform(jax.random.fold_in(keys[3], l),
                               (fan_in, neuron_per_hidden_layer),
                               minval=-bound, maxval=bound, dtype=jnp.float32)
        b = jax.random.uniform(jax.random.fold_in(keys[4], l),
                               (neuron_per_hidden_layer,),
                               minval=-bound, maxval=bound, dtype=jnp.float32)
        weights.append(w)
        biases.append(b)
        fan_in = neuron_per_hidden_layer

    # ---- test 1: tiny batch (matches module default usage), single tile ----
    batch = 2
    fo_emb, so_emb, Xv = _build_inputs(keys, feature_sizes, fo_tables, so_tables, batch)
    last_pred, pred_per_layer = deepfm_onn_forward(
        fo_emb, so_emb, Xv, bias, weights, biases)
    last_pred = jax.block_until_ready(last_pred)
    pred_per_layer = jax.block_until_ready(pred_per_layer)

    ref_last, ref_all = reference_forward(fo_emb, so_emb, Xv, bias, weights, biases)
    assert pred_per_layer.shape == (num_hidden_layers, batch)
    assert last_pred.shape == (batch,)
    assert jnp.allclose(pred_per_layer, ref_all, atol=1e-5, rtol=1e-5)
    assert jnp.allclose(last_pred, ref_last, atol=1e-5, rtol=1e-5)

    # ---- test 2: larger batch, exercises the multi-block batch grid ----
    batch2 = 384
    fo_emb2, so_emb2, Xv2 = _build_inputs(keys, feature_sizes, fo_tables, so_tables, batch2)
    last2, all2 = deepfm_onn_forward(
        fo_emb2, so_emb2, Xv2, bias, weights, biases, max_batch_tile=128)
    last2 = jax.block_until_ready(last2)
    all2 = jax.block_until_ready(all2)

    ref_last2, ref_all2 = reference_forward(fo_emb2, so_emb2, Xv2, bias, weights, biases)
    assert all2.shape == (num_hidden_layers, batch2)
    assert last2.shape == (batch2,)
    assert jnp.allclose(all2, ref_all2, atol=1e-5, rtol=1e-5)
    assert jnp.allclose(last2, ref_last2, atol=1e-5, rtol=1e-5)

    print("KERNEL_OK")
</pallas_src>

<mosaic_0001>
module attributes {stable_mosaic.version = 11 : i64} {
  func.func @kernel(%arg0: i32, %arg1: memref<8x128xf32, #tpu.memory_space<vmem>>, %arg2: memref<8x4x128xf32, #tpu.memory_space<vmem>>, %arg3: memref<8x128xf32, #tpu.memory_space<vmem>>, %arg4: memref<1xf32, #tpu.memory_space<smem>>, %arg5: memref<32x4xf32, #tpu.memory_space<vmem>>, %arg6: memref<32x1xf32, #tpu.memory_space<vmem>>, %arg7: memref<32x32xf32, #tpu.memory_space<vmem>>, %arg8: memref<32x1xf32, #tpu.memory_space<vmem>>, %arg9: memref<2x128xf32, #tpu.memory_space<vmem>>) attributes {dimension_semantics = [#tpu.dimension_semantics<parallel>], iteration_bounds = array<i64: 1>, scalar_prefetch = 0 : i64, scratch_operands = 0 : i64, tpu.core_type = #tpu.core_type<tc>, window_params = [{transform_indices = @transform_0, window_bounds = array<i64: 8, 128>}, {transform_indices = @transform_1, window_bounds = array<i64: 8, 4, 128>}, {transform_indices = @transform_2, window_bounds = array<i64: 8, 128>}, {transform_indices = @transform_3, window_bounds = array<i64: 1>}, {pipeline_mode = #tpu.pipeline_mode<synchronous>, transform_indices = @transform_4, window_bounds = array<i64: 32, 4>}, {pipeline_mode = #tpu.pipeline_mode<synchronous>, transform_indices = @transform_5, window_bounds = array<i64: 32, 1>}, {pipeline_mode = #tpu.pipeline_mode<synchronous>, transform_indices = @transform_6, window_bounds = array<i64: 32, 32>}, {pipeline_mode = #tpu.pipeline_mode<synchronous>, transform_indices = @transform_7, window_bounds = array<i64: 32, 1>}, {transform_indices = @transform_8, window_bounds = array<i64: 2, 128>}]} {
    %c0 = arith.constant 0 : index
    %c0_0 = arith.constant 0 : index
    %0 = vector.load %arg1[%c0, %c0_0] : memref<8x128xf32, #tpu.memory_space<vmem>>, vector<8x128xf32>
    %c0_1 = arith.constant 0 : index
    %c0_2 = arith.constant 0 : index
    %c0_3 = arith.constant 0 : index
    %1 = vector.load %arg2[%c0_1, %c0_2, %c0_3] : memref<8x4x128xf32, #tpu.memory_space<vmem>>, vector<8x4x128xf32>
    %c0_4 = arith.constant 0 : index
    %c0_5 = arith.constant 0 : index
    %2 = vector.load %arg3[%c0_4, %c0_5] : memref<8x128xf32, #tpu.memory_space<vmem>>, vector<8x128xf32>
    %3 = arith.mulf %0, %2 : vector<8x128xf32>
    %4 = vector.shape_cast %2 : vector<8x128xf32> to vector<8x1x128xf32>
    %5 = vector.broadcast %4 : vector<8x1x128xf32> to vector<8x4x128xf32>
    %6 = arith.mulf %1, %5 : vector<8x4x128xf32>
    %cst = arith.constant dense<0.000000e+00> : vector<4x128xf32>
    %7 = vector.multi_reduction <add>, %6, %cst [0] : vector<8x4x128xf32> to vector<4x128xf32>
    %8 = arith.mulf %6, %6 : vector<8x4x128xf32>
    %cst_6 = arith.constant dense<0.000000e+00> : vector<4x128xf32>
    %9 = vector.multi_reduction <add>, %8, %cst_6 [0] : vector<8x4x128xf32> to vector<4x128xf32>
    %10 = arith.mulf %7, %7 : vector<4x128xf32>
    %11 = arith.subf %10, %9 : vector<4x128xf32>
    %cst_7 = arith.constant 5.000000e-01 : f32
    %12 = vector.broadcast %cst_7 : f32 to vector<4x128xf32>
    %13 = arith.mulf %12, %11 : vector<4x128xf32>
    %cst_8 = arith.constant dense<0.000000e+00> : vector<128xf32>
    %14 = vector.multi_reduction <add>, %3, %cst_8 [0] : vector<8x128xf32> to vector<128xf32>
    %15 = vector.shape_cast %14 : vector<128xf32> to vector<1x128xf32>
    %cst_9 = arith.constant dense<0.000000e+00> : vector<128xf32>
    %16 = vector.multi_reduction <add>, %13, %cst_9 [0] : vector<4x128xf32> to vector<128xf32>
    %17 = vector.shape_cast %16 : vector<128xf32> to vector<1x128xf32>
    %18 = arith.addf %15, %17 : vector<1x128xf32>
    %c0_10 = arith.constant 0 : index
    %19 = memref.load %arg4[%c0_10] : memref<1xf32, #tpu.memory_space<smem>>
    %20 = vector.broadcast %19 : f32 to vector<1x128xf32>
    %21 = arith.addf %18, %20 : vector<1x128xf32>
    %c0_11 = arith.constant 0 : index
    %c0_12 = arith.constant 0 : index
    %22 = vector.load %arg5[%c0_11, %c0_12] : memref<32x4xf32, #tpu.memory_space<vmem>>, vector<32x4xf32>
    %c0_13 = arith.constant 0 : index
    %c0_14 = arith.constant 0 : index
    %23 = vector.load %arg6[%c0_13, %c0_14] : memref<32x1xf32, #tpu.memory_space<vmem>>, vector<32x1xf32>
    %cst_15 = arith.constant dense<0.000000e+00> : vector<32x128xf32>
    %24 = tpu.matmul %22, %13, %cst_15 {dimension_numbers = #tpu.dot_dimension_numbers<[1], [0], [0], [1], [0, 0, 1, 1], [], []>} : vector<32x4xf32>, vector<4x128xf32>, vector<32x128xf32> -> vector<32x128xf32>
    %25 = vector.broadcast %23 : vector<32x1xf32> to vector<32x128xf32>
    %26 = arith.addf %24, %25 : vector<32x128xf32>
    %cst_16 = arith.constant 0.000000e+00 : f32
    %27 = vector.broadcast %cst_16 : f32 to vector<32x128xf32>
    %28 = arith.maximumf %26, %27 : vector<32x128xf32>
    %cst_17 = arith.constant dense<0.000000e+00> : vector<128xf32>
    %29 = vector.multi_reduction <add>, %28, %cst_17 [0] : vector<32x128xf32> to vector<128xf32>
    %30 = vector.shape_cast %29 : vector<128xf32> to vector<1x128xf32>
    %31 = arith.addf %21, %30 : vector<1x128xf32>
    %32 = arith.negf %31 : vector<1x128xf32>
    %33 = math.exp %32 : vector<1x128xf32>
    %cst_18 = arith.constant 1.000000e+00 : f32
    %34 = vector.broadcast %cst_18 : f32 to vector<1x128xf32>
    %35 = arith.addf %34, %33 : vector<1x128xf32>
    %36 = arith.divf %34, %35 : vector<1x128xf32>
    %c0_19 = arith.constant 0 : index
    %c0_20 = arith.constant 0 : index
    %37 = vector.load %arg9[%c0_19, %c0_20] : memref<2x128xf32, #tpu.memory_space<vmem>>, vector<1x128xf32>
    tpu.vector_store %arg9[%c0_19, %c0_20], %36 {strides = array<i32>} : memref<2x128xf32, #tpu.memory_space<vmem>>, vector<1x128xf32>,
    %c0_21 = arith.constant 0 : index
    %c0_22 = arith.constant 0 : index
    %38 = vector.load %arg7[%c0_21, %c0_22] : memref<32x32xf32, #tpu.memory_space<vmem>>, vector<32x32xf32>
    %c0_23 = arith.constant 0 : index
    %c0_24 = arith.constant 0 : index
    %39 = vector.load %arg8[%c0_23, %c0_24] : memref<32x1xf32, #tpu.memory_space<vmem>>, vector<32x1xf32>
    %cst_25 = arith.constant dense<0.000000e+00> : vector<32x128xf32>
    %40 = tpu.matmul %38, %28, %cst_25 {dimension_numbers = #tpu.dot_dimension_numbers<[1], [0], [0], [1], [0, 0, 1, 1], [], []>} : vector<32x32xf32>, vector<32x128xf32>, vector<32x128xf32> -> vector<32x128xf32>
    %41 = vector.broadcast %39 : vector<32x1xf32> to vector<32x128xf32>
    %42 = arith.addf %40, %41 : vector<32x128xf32>
    %cst_26 = arith.constant 0.000000e+00 : f32
    %43 = vector.broadcast %cst_26 : f32 to vector<32x128xf32>
    %44 = arith.maximumf %42, %43 : vector<32x128xf32>
    %cst_27 = arith.constant dense<0.000000e+00> : vector<128xf32>
    %45 = vector.multi_reduction <add>, %44, %cst_27 [0] : vector<32x128xf32> to vector<128xf32>
    %46 = vector.shape_cast %45 : vector<128xf32> to vector<1x128xf32>
    %47 = arith.addf %21, %46 : vector<1x128xf32>
    %48 = arith.negf %47 : vector<1x128xf32>
    %49 = math.exp %48 : vector<1x128xf32>
    %cst_28 = arith.constant 1.000000e+00 : f32
    %50 = vector.broadcast %cst_28 : f32 to vector<1x128xf32>
    %51 = arith.addf %50, %49 : vector<1x128xf32>
    %52 = arith.divf %50, %51 : vector<1x128xf32>
    %c1 = arith.constant 1 : index
    %c0_29 = arith.constant 0 : index
    %53 = vector.load %arg9[%c1, %c0_29] : memref<2x128xf32, #tpu.memory_space<vmem>>, vector<1x128xf32>
    tpu.vector_store %arg9[%c1, %c0_29], %52 {strides = array<i32>} : memref<2x128xf32, #tpu.memory_space<vmem>>, vector<1x128xf32>,
    return
  }
  func.func @transform_0(%arg0: i32) -> (i32, i32) {
    %c0_i32 = arith.constant 0 : i32
    %c0_i32_0 = arith.constant 0 : i32
    return %c0_i32, %arg0 : i32, i32
  }
  func.func @transform_1(%arg0: i32) -> (i32, i32, i32) {
    %c0_i32 = arith.constant 0 : i32
    %c0_i32_0 = arith.constant 0 : i32
    %c0_i32_1 = arith.constant 0 : i32
    return %c0_i32, %c0_i32_0, %arg0 : i32, i32, i32
  }
  func.func @transform_2(%arg0: i32) -> (i32, i32) {
    %c0_i32 = arith.constant 0 : i32
    %c0_i32_0 = arith.constant 0 : i32
    return %c0_i32, %arg0 : i32, i32
  }
  func.func @transform_3(%arg0: i32) -> i32 {
    %c0_i32 = arith.constant 0 : i32
    %c0_i32_0 = arith.constant 0 : i32
    return %c0_i32 : i32
  }
  func.func @transform_4(%arg0: i32) -> (i32, i32) {
    %c0_i32 = arith.constant 0 : i32
    %c0_i32_0 = arith.constant 0 : i32
    %c0_i32_1 = arith.constant 0 : i32
    return %c0_i32, %c0_i32_0 : i32, i32
  }
  func.func @transform_5(%arg0: i32) -> (i32, i32) {
    %c0_i32 = arith.constant 0 : i32
    %c0_i32_0 = arith.constant 0 : i32
    %c0_i32_1 = arith.constant 0 : i32
    return %c0_i32, %c0_i32_0 : i32, i32
  }
  func.func @transform_6(%arg0: i32) -> (i32, i32) {
    %c0_i32 = arith.constant 0 : i32
    %c0_i32_0 = arith.constant 0 : i32
    %c0_i32_1 = arith.constant 0 : i32
    return %c0_i32, %c0_i32_0 : i32, i32
  }
  func.func @transform_7(%arg0: i32) -> (i32, i32) {
    %c0_i32 = arith.constant 0 : i32
    %c0_i32_0 = arith.constant 0 : i32
    %c0_i32_1 = arith.constant 0 : i32
    return %c0_i32, %c0_i32_0 : i32, i32
  }
  func.func @transform_8(%arg0: i32) -> (i32, i32) {
    %c0_i32 = arith.constant 0 : i32
    %c0_i32_0 = arith.constant 0 : i32
    return %c0_i32, %arg0 : i32, i32
  }
}

</mosaic_0001>

<llo_original>
// kernel: tpu_custom_call.1
$region0: #{tpu_custom_call.1}
  #allocation0 [shape = 'u32[]', space=smem, size = 0x4, offset = 0x4, fixed_abs, tag = 'smem constant byte address 0x4 - core index']
  #allocation1 [shape = 'u32[144,128]{1,0:T(1,128)}', space=vmem, size = 0x12000, scoped, tag = 'internal scratch']
  #allocation2 [shape = 'f32[1]{0:T(128)S(6)}', space=smem, size = 0x200, scoped, tag = 'scoped memory for tpu_custom_call.1']
  %s0 = inlined_call_operand.vmem [shape: f32[8,128], index: 0, kind: input, shape index: {}]
  %s1 = inlined_call_operand.vmem [shape: f32[8,4,128], index: 1, kind: input, shape index: {}]
  %s2 = inlined_call_operand.vmem [shape: f32[8,128], index: 2, kind: input, shape index: {}]
  %s3 = inlined_call_operand.<no memory space> [shape: f32[1], index: 3, kind: input, shape index: {}]
  %s4 = inlined_call_operand.vmem [shape: f32[32,4], index: 4, kind: input, shape index: {}]
  %s5 = inlined_call_operand.vmem [shape: f32[32,1], index: 5, kind: input, shape index: {}]
  %s6 = inlined_call_operand.vmem [shape: f32[32,32], index: 6, kind: input, shape index: {}]
  %s7 = inlined_call_operand.vmem [shape: f32[32,1], index: 7, kind: input, shape index: {}]
  %s8 = inlined_call_operand.hbm [shape: f32[2,128], index: 8, kind: output, shape index: {}]
  %s9 = sld [smem:[#allocation0]]
  $region42: #{tpu_custom_call.1} parent=0
    _
  %s11 = ssub.s32 1, %s9
  %s12 = scalar_select 0, %s11, %s9
  %13 = sst [smem:[#allocation2]] %s3
  $region1: #{tpu_custom_call.1} parent=0
    #allocation3 [shape = 'u8[1024]{0}', space=vmem, size = 0x400, scoped, tag = 'output window, operand 0, single buffered']
    #allocation4 [shape = 's32[1]{0}', space=sflag, size = 0x4, scoped, tag = 'scoped memory for tpu_custom_call.1']
    %14 = vsyncpa [#allocation4], 0
    // Predicated region
    $region2: #{tpu_custom_call.1} parent=1 // pred_check
      _
    $region3: #{tpu_custom_call.1} parent=1 // pred_check_branch
      %16 = sbr.rel (0) target = $region5
    $region4: #{tpu_custom_call.1} parent=1 // pred_region
      _
    $region5: #{tpu_custom_call.1} parent=1 // pred_fallthru
      _
    // Predicated region
    $region6: #{tpu_custom_call.1} parent=1 // pred_check
      _
    $region7: #{tpu_custom_call.1} parent=1 // pred_check_branch
      %18 = sbr.rel (0) target = $region9
    $region8: #{tpu_custom_call.1} parent=1 // pred_region
      _
    $region9: #{tpu_custom_call.1} parent=1 // pred_fallthru
      _
    // Predicated region
    $region10: #{tpu_custom_call.1} parent=1 // pred_check
      _
    $region11: #{tpu_custom_call.1} parent=1 // pred_check_branch
      %20 = sbr.rel (0) target = $region13
    $region12: #{tpu_custom_call.1} parent=1 // pred_region
      _
    $region13: #{tpu_custom_call.1} parent=1 // pred_fallthru
      _
    // Predicated region
    $region14: #{tpu_custom_call.1} parent=1 // pred_check
      _
    $region15: #{tpu_custom_call.1} parent=1 // pred_check_branch
      %22 = sbr.rel (0) target = $region17
    $region16: #{tpu_custom_call.1} parent=1 // pred_region
      _
    $region17: #{tpu_custom_call.1} parent=1 // pred_fallthru
      _
    // Predicated region
    $region18: #{tpu_custom_call.1} parent=1 // pred_check
      _
    $region19: #{tpu_custom_call.1} parent=1 // pred_check_branch
      %24 = sbr.rel (0) target = $region21
    $region20: #{tpu_custom_call.1} parent=1 // pred_region
      _
    $region21: #{tpu_custom_call.1} parent=1 // pred_fallthru
      _
    // Predicated region
    $region22: #{tpu_custom_call.1} parent=1 // pred_check
      _
    $region23: #{tpu_custom_call.1} parent=1 // pred_check_branch
      %26 = sbr.rel (0) target = $region25
    $region24: #{tpu_custom_call.1} parent=1 // pred_region
      _
    $region25: #{tpu_custom_call.1} parent=1 // pred_fallthru
      _
    // Predicated region
    $region26: #{tpu_custom_call.1} parent=1 // pred_check
      _
    $region27: #{tpu_custom_call.1} parent=1 // pred_check_branch
      %28 = sbr.rel (0) target = $region29
    $region28: #{tpu_custom_call.1} parent=1 // pred_region
      _
    $region29: #{tpu_custom_call.1} parent=1 // pred_fallthru
      _
    // Predicated region
    $region30: #{tpu_custom_call.1} parent=1 // pred_check
      _
    $region31: #{tpu_custom_call.1} parent=1 // pred_check_branch
      %30 = sbr.rel (0) target = $region33
    $region32: #{tpu_custom_call.1} parent=1 // pred_region
      _
    $region33: #{tpu_custom_call.1} parent=1 // pred_fallthru
      _
    %v31 = vld [vmem:[%s0] sm:$0xff]
    %v32 = vld [vmem:[%s1] sm:$0xf]
    %v33 = vld [vmem:[%s1 + $0x4] sm:$0xf]
    %v34 = vld [vmem:[%s1 + $0x8] sm:$0xf]
    %v35 = vld [vmem:[%s1 + $0xc] sm:$0xf]
    %v36 = vld [vmem:[%s1 + $0x10] sm:$0xf]
    %v37 = vld [vmem:[%s1 + $0x14] sm:$0xf]
    %v38 = vld [vmem:[%s1 + $0x18] sm:$0xf]
    %v39 = vld [vmem:[%s1 + $0x1c] sm:$0xf]
    %v40 = vld [vmem:[%s2] sm:$0xff]
    %v41 = vmul.f32 %v31, %v40
    %v43 = vcombine.high %v40, %v40
    %v45 = vunpack.c.l.s4 1966171168
    %v46 = vunpack.c.0.s8 %v45
    %v47 = vlaneseq
    %v48 = vshrl.u32 %v47, 7
    %v49 = vsub.s32 %v46, %v48
    %v50 = vrot.slane %v40, %v49
    %v52 = vunpack.c.l.s4 1966171168
    %v53 = vunpack.c.0.s8 %v52
    %v54 = vlaneseq
    %v55 = vshrl.u32 %v54, 7
    %v56 = vsub.s32 %v53, %v55
    %v57 = vrot.slane %v43, %v56
    %v58 = vcombine.high %v50, %v50
    %v59 = vcombine.high %v57, %v57
    %v61 = vunpack.c.l.s4 1966171168
    %v62 = vunpack.c.0.s8 %v61
    %v63 = vlaneseq
    %v64 = vshrl.u32 %v63, 7
    %v65 = vsub.s32 %v62, %v64
    %v66 = vrot.slane %v50, %v65
    %v68 = vunpack.c.l.s4 1966171168
    %v69 = vunpack.c.0.s8 %v68
    %v70 = vlaneseq
    %v71 = vshrl.u32 %v70, 7
    %v72 = vsub.s32 %v69, %v71
    %v73 = vrot.slane %v57, %v72
    %v75 = vunpack.c.l.s4 1966171168
    %v76 = vunpack.c.0.s8 %v75
    %v77 = vlaneseq
    %v78 = vshrl.u32 %v77, 7
    %v79 = vsub.s32 %v76, %v78
    %v80 = vrot.slane %v58, %v79
    %v82 = vunpack.c.l.s4 1966171168
    %v83 = vunpack.c.0.s8 %v82
    %v84 = vlaneseq
    %v85 = vshrl.u32 %v84, 7
    %v86 = vsub.s32 %v83, %v85
    %v87 = vrot.slane %v59, %v86
    %v88 = vcombine.high %v66, %v66
    %v89 = vcombine.high %v73, %v73
    %v90 = vcombine.high %v80, %v80
    %v91 = vcombine.high %v87, %v87
    %v92 = vlaneseq
    %v93 = vshrl.u32 %v92, 7
    %v94 = vsub.s32 0, %v93
    %v95 = vrot.slane %v66, %v94
    %v96 = vlaneseq
    %v97 = vshrl.u32 %v96, 7
    %v98 = vsub.s32 0, %v97
    %v99 = vrot.slane %v80, %v98
    %v100 = vlaneseq
    %v101 = vshrl.u32 %v100, 7
    %v102 = vsub.s32 0, %v101
    %v103 = vrot.slane %v88, %v102
    %v104 = vlaneseq
    %v105 = vshrl.u32 %v104, 7
    %v106 = vsub.s32 0, %v105
    %v107 = vrot.slane %v90, %v106
    %v108 = vlaneseq
    %v109 = vshrl.u32 %v108, 7
    %v110 = vsub.s32 0, %v109
    %v111 = vrot.slane %v73, %v110
    %v112 = vlaneseq
    %v113 = vshrl.u32 %v112, 7
    %v114 = vsub.s32 0, %v113
    %v115 = vrot.slane %v87, %v114
    %v116 = vlaneseq
    %v117 = vshrl.u32 %v116, 7
    %v118 = vsub.s32 0, %v117
    %v119 = vrot.slane %v89, %v118
    %v120 = vlaneseq
    %v121 = vshrl.u32 %v120, 7
    %v122 = vsub.s32 0, %v121
    %v123 = vrot.slane %v91, %v122
    %v132 = vmul.f32 %v32, %v95
    %v133 = vmul.f32 %v33, %v99
    %v134 = vmul.f32 %v34, %v103
    %v135 = vmul.f32 %v35, %v107
    %v136 = vmul.f32 %v36, %v111
    %v137 = vmul.f32 %v37, %v115
    %v138 = vmul.f32 %v38, %v119
    %v139 = vmul.f32 %v39, %v123
    %vm140 = vcmask 1043456
    %v141 = vsel %vm140, %v132, 0.0
    %v142 = vsel %vm140, %v133, 0.0
    %v143 = vadd.f32 %v141, %v142
    %v144 = vsel %vm140, %v134, 0.0
    %v145 = vadd.f32 %v143, %v144
    %v146 = vsel %vm140, %v135, 0.0
    %v147 = vadd.f32 %v145, %v146
    %v148 = vsel %vm140, %v136, 0.0
    %v149 = vadd.f32 %v147, %v148
    %v150 = vsel %vm140, %v137, 0.0
    %v151 = vadd.f32 %v149, %v150
    %v152 = vsel %vm140, %v138, 0.0
    %v153 = vadd.f32 %v151, %v152
    %v154 = vsel %vm140, %v139, 0.0
    %v155 = vadd.f32 %v153, %v154
    %v156 = vmul.f32 %v132, %v132
    %v157 = vmul.f32 %v133, %v133
    %v158 = vmul.f32 %v134, %v134
    %v159 = vmul.f32 %v135, %v135
    %v160 = vmul.f32 %v136, %v136
    %v161 = vmul.f32 %v137, %v137
    %v162 = vmul.f32 %v138, %v138
    %v163 = vmul.f32 %v139, %v139
    %v164 = vsel %vm140, %v156, 0.0
    %v165 = vsel %vm140, %v157, 0.0
    %v166 = vadd.f32 %v164, %v165
    %v167 = vsel %vm140, %v158, 0.0
    %v168 = vadd.f32 %v166, %v167
    %v169 = vsel %vm140, %v159, 0.0
    %v170 = vadd.f32 %v168, %v169
    %v171 = vsel %vm140, %v160, 0.0
    %v172 = vadd.f32 %v170, %v171
    %v173 = vsel %vm140, %v161, 0.0
    %v174 = vadd.f32 %v172, %v173
    %v175 = vsel %vm140, %v162, 0.0
    %v176 = vadd.f32 %v174, %v175
    %v177 = vsel %vm140, %v163, 0.0
    %v178 = vadd.f32 %v176, %v177
    %v179 = vmul.f32 %v155, %v155
    %v180 = vsub.f32 %v179, %v178
    %v181 = vmul.f32 %v180, 0.5
    %v182 = vrot.slane %v41, 4
    %v183 = vadd.f32 %v41, %v182
    %v184 = vrot.slane %v183, 2
    %v185 = vadd.f32 %v183, %v184
    %v186 = vrot.slane %v185, 1
    %v187 = vadd.f32 %v185, %v186
    %v188 = vsel %vm140, %v181, 0.0
    %v189 = vrot.slane %v188, 4
    %v190 = vadd.f32 %v188, %v189
    %v191 = vrot.slane %v190, 2
    %v192 = vadd.f32 %v190, %v191
    %v193 = vrot.slane %v192, 1
    %v194 = vadd.f32 %v192, %v193
    %v195 = vadd.f32 %v187, %v194
    %s196 = sld [smem:[#allocation2]]
    %v197 = vstv %s196
    %v198 = vadd.f32 %v195, %v197
    %v199 = vld [vmem:[%s4] sm:$0xff]
    %v200 = vld [vmem:[%s4 + $0x8] sm:$0xff]
    %v201 = vld [vmem:[%s4 + $0x10] sm:$0xff]
    %v202 = vld [vmem:[%s4 + $0x18] sm:$0xff]
    %v203 = vld [vmem:[%s5] sm:$0xff]
    %v204 = vld [vmem:[%s5 + $0x8] sm:$0xff]
    %v205 = vld [vmem:[%s5 + $0x10] sm:$0xff]
    %v206 = vld [vmem:[%s5 + $0x18] sm:$0xff]
    %208 = vset.pattern.permute.xlu0 0
    %209 = vperm.xlu0 %208, %v203
    %v210 = vpop.permute.xlu0 %209
    %213 = vset.pattern.permute.xlu0 0
    %214 = vperm.xlu0 %213, %v204
    %v215 = vpop.permute.xlu0 %214
    %218 = vset.pattern.permute.xlu0 0
    %219 = vperm.xlu0 %218, %v205
    %v220 = vpop.permute.xlu0 %219
    %223 = vset.pattern.permute.xlu0 0
    %224 = vperm.xlu0 %223, %v206
    %v225 = vpop.permute.xlu0 %224
    %vm227 = vcmask 31744
    %v229 = vsel %vm227, %v199, 0
    %v232 = vsel %vm227, %v200, 0
    %v235 = vsel %vm227, %v201, 0
    %v238 = vsel %vm227, %v202, 0
    %v241 = vsel %vm140, %v181, 0
    %243 = vmatprep.subr.mxu0 0.0
    %244 = vmatpush1.msra.mxu0 %v241
    %245 = vmatprep.subr.mxu0 0.0
    %246 = vmatpush1.msra.mxu0 0.0
    %247 = vmatprep.subr.mxu0 0.0
    %248 = vmatpush1.msra.mxu0 0.0
    %249 = vmatprep.subr.mxu0 0.0
    %250 = vmatpush1.msra.mxu0 0.0
    %251 = vmatprep.subr.mxu0 0.0
    %252 = vmatpush1.msra.mxu0 0.0
    %253 = vmatprep.subr.mxu0 0.0
    %254 = vmatpush1.msra.mxu0 0.0
    %255 = vmatprep.subr.mxu0 0.0
    %256 = vmatpush1.msra.mxu0 0.0
    %257 = vmatprep.subr.mxu0 0.0
    %258 = vmatpush1.msra.mxu0 0.0
    %259 = vmatprep.subr.mxu0 0.0
    %260 = vmatpush1.msra.mxu0 0.0
    %261 = vmatprep.subr.mxu0 0.0
    %262 = vmatpush1.msra.mxu0 0.0
    %263 = vmatprep.subr.mxu0 0.0
    %264 = vmatpush1.msra.mxu0 0.0
    %265 = vmatprep.subr.mxu0 0.0
    %266 = vmatpush1.msra.mxu0 0.0
    %267 = vmatprep.subr.mxu0 0.0
    %268 = vmatpush1.msra.mxu0 0.0
    %269 = vmatprep.subr.mxu0 0.0
    %270 = vmatpush1.msra.mxu0 0.0
    %271 = vmatprep.subr.mxu0 0.0
    %272 = vmatpush1.msra.mxu0 0.0
    %273 = vmatprep.subr.mxu0 0.0
    %274 = vmatpush1.msra.mxu0 0.0
    %275 = vmatprep.subr.mxu0 0.0
    %276 = vmatpush1.msra.mxu0 0.0
    %277 = vmatprep.subr.mxu0 0.0
    %278 = vmatpush1.msra.mxu0 0.0
    %279 = vmatprep.subr.mxu0 0.0
    %280 = vmatpush1.msra.mxu0 0.0
    %281 = vmatprep.subr.mxu0 0.0
    %282 = vmatpush1.msra.mxu0 0.0
    %283 = vmatprep.subr.mxu0 0.0
    %284 = vmatpush1.msra.mxu0 0.0
    %285 = vmatprep.subr.mxu0 0.0
    %286 = vmatpush1.msra.mxu0 0.0
    %287 = vmatprep.subr.mxu0 0.0
    %288 = vmatpush1.msra.mxu0 0.0
    %289 = vmatprep.subr.mxu0 0.0
    %290 = vmatpush1.msra.mxu0 0.0
    %291 = vmatprep.subr.mxu0 0.0
    %292 = vmatpush1.msra.mxu0 0.0
    %293 = vmatprep.subr.mxu0 0.0
    %294 = vmatpush1.msra.mxu0 0.0
    %295 = vmatprep.subr.mxu0 0.0
    %296 = vmatpush1.msra.mxu0 0.0
    %297 = vmatprep.subr.mxu0 0.0
    %298 = vmatpush1.msra.mxu0 0.0
    %299 = vmatprep.subr.mxu0 0.0
    %300 = vmatpush1.msra.mxu0 0.0
    %301 = vmatprep.subr.mxu0 0.0
    %302 = vmatpush1.msra.mxu0 0.0
    %303 = vmatprep.subr.mxu0 0.0
    %304 = vmatpush1.msra.mxu0 0.0
    %305 = vmatprep.subr.mxu0 0.0
    %306 = vmatpush1.msra.mxu0 0.0
    %307 = vmatprep.mubr.f32.mxu0 0.0
    %308 = vmatmul.mubr.f32.gmra.mrb[0].mxu0 %v229
    %v309 = vpop.f32.mrb[0].mxu0
    %v310 = vadd.f32 %v210, %v309
    %v311 = vpop.f32.mrb[0].mxu0
    %312 = vmatprep.mubr.f32.mxu0 0.0
    %313 = vmatmul.mubr.f32.gmra.mrb[0].mxu0 %v232
    %v314 = vpop.f32.mrb[0].mxu0
    %v315 = vadd.f32 %v215, %v314
    %v316 = vpop.f32.mrb[0].mxu0
    %317 = vmatprep.mubr.f32.mxu0 0.0
    %318 = vmatmul.mubr.f32.gmra.mrb[0].mxu0 %v235
    %v319 = vpop.f32.mrb[0].mxu0
    %v320 = vadd.f32 %v220, %v319
    %v321 = vpop.f32.mrb[0].mxu0
    %322 = vmatprep.mubr.f32.mxu0 0.0
    %323 = vmatmul.mubr.f32.gmra.mrb[0].mxu0 %v238
    %v324 = vpop.f32.mrb[0].mxu0
    %v325 = vadd.f32 %v225, %v324
    %v326 = vpop.f32.mrb[0].mxu0
    %327 = vdwg.mxu0
    %v328 = vmax.f32 %v310, 0.0
    %v329 = vmax.f32 %v315, 0.0
    %v330 = vmax.f32 %v320, 0.0
    %v331 = vmax.f32 %v325, 0.0
    %v332 = vadd.f32 %v328, %v329
    %v333 = vadd.f32 %v332, %v330
    %v334 = vadd.f32 %v333, %v331
    %v335 = vrot.slane %v334, 4
    %v336 = vadd.f32 %v334, %v335
    %v337 = vrot.slane %v336, 2
    %v338 = vadd.f32 %v336, %v337
    %v339 = vrot.slane %v338, 1
    %v340 = vadd.f32 %v338, %v339
    %v341 = vadd.f32 %v198, %v340
    %v342 = vxor.u32 %v341, 2147483648
    %v343 = vmul.f32 %v342, 1.442695
    %v344 = vpow.pop %v343
    %v345 = vadd.f32 %v344, 1.0
    %v346 = vrcp.pop %v345
    %v347 = vmul.f32 1.0, %v346
    %348 = vst [vmem:[#allocation3] sm:$0x1] %v347
    %v349 = vld [vmem:[%s6] sm:$0xff]
    %v350 = vld [vmem:[%s6 + $0x8] sm:$0xff]
    %v351 = vld [vmem:[%s6 + $0x10] sm:$0xff]
    %v352 = vld [vmem:[%s6 + $0x18] sm:$0xff]
    %v353 = vld [vmem:[%s7] sm:$0xff]
    %v354 = vld [vmem:[%s7 + $0x8] sm:$0xff]
    %v355 = vld [vmem:[%s7 + $0x10] sm:$0xff]
    %v356 = vld [vmem:[%s7 + $0x18] sm:$0xff]
    %358 = vset.pattern.permute.xlu0 0
    %359 = vperm.xlu0 %358, %v353
    %v360 = vpop.permute.xlu0 %359
    %363 = vset.pattern.permute.xlu0 0
    %364 = vperm.xlu0 %363, %v354
    %v365 = vpop.permute.xlu0 %364
    %368 = vset.pattern.permute.xlu0 0
    %369 = vperm.xlu0 %368, %v355
    %v370 = vpop.permute.xlu0 %369
    %373 = vset.pattern.permute.xlu0 0
    %374 = vperm.xlu0 %373, %v356
    %v375 = vpop.permute.xlu0 %374
    %vm377 = vcmask 261120
    %v379 = vsel %vm377, %v349, 0
    %v382 = vsel %vm377, %v350, 0
    %v385 = vsel %vm377, %v351, 0
    %v388 = vsel %vm377, %v352, 0
    %390 = vmatprep.subr.mxu0 0.0
    %391 = vmatpush1.msra.mxu0 %v328
    %392 = vmatprep.subr.mxu0 0.0
    %393 = vmatpush1.msra.mxu0 %v329
    %394 = vmatprep.subr.mxu0 0.0
    %395 = vmatpush1.msra.mxu0 %v330
    %396 = vmatprep.subr.mxu0 0.0
    %397 = vmatpush1.msra.mxu0 %v331
    %398 = vmatprep.subr.mxu0 0.0
    %399 = vmatpush1.msra.mxu0 0.0
    %400 = vmatprep.subr.mxu0 0.0
    %401 = vmatpush1.msra.mxu0 0.0
    %402 = vmatprep.subr.mxu0 0.0
    %403 = vmatpush1.msra.mxu0 0.0
    %404 = vmatprep.subr.mxu0 0.0
    %405 = vmatpush1.msra.mxu0 0.0
    %406 = vmatprep.subr.mxu0 0.0
    %407 = vmatpush1.msra.mxu0 0.0
    %408 = vmatprep.subr.mxu0 0.0
    %409 = vmatpush1.msra.mxu0 0.0
    %410 = vmatprep.subr.mxu0 0.0
    %411 = vmatpush1.msra.mxu0 0.0
    %412 = vmatprep.subr.mxu0 0.0
    %413 = vmatpush1.msra.mxu0 0.0
    %414 = vmatprep.subr.mxu0 0.0
    %415 = vmatpush1.msra.mxu0 0.0
    %416 = vmatprep.subr.mxu0 0.0
    %417 = vmatpush1.msra.mxu0 0.0
    %418 = vmatprep.subr.mxu0 0.0
    %419 = vmatpush1.msra.mxu0 0.0
    %420 = vmatprep.subr.mxu0 0.0
    %421 = vmatpush1.msra.mxu0 0.0
    %422 = vmatprep.subr.mxu0 0.0
    %423 = vmatpush1.msra.mxu0 0.0
    %424 = vmatprep.subr.mxu0 0.0
    %425 = vmatpush1.msra.mxu0 0.0
    %426 = vmatprep.subr.mxu0 0.0
    %427 = vmatpush1.msra.mxu0 0.0
    %428 = vmatprep.subr.mxu0 0.0
    %429 = vmatpush1.msra.mxu0 0.0
    %430 = vmatprep.subr.mxu0 0.0
    %431 = vmatpush1.msra.mxu0 0.0
    %432 = vmatprep.subr.mxu0 0.0
    %433 = vmatpush1.msra.mxu0 0.0
    %434 = vmatprep.subr.mxu0 0.0
    %435 = vmatpush1.msra.mxu0 0.0
    %436 = vmatprep.subr.mxu0 0.0
    %437 = vmatpush1.msra.mxu0 0.0
    %438 = vmatprep.subr.mxu0 0.0
    %439 = vmatpush1.msra.mxu0 0.0
    %440 = vmatprep.subr.mxu0 0.0
    %441 = vmatpush1.msra.mxu0 0.0
    %442 = vmatprep.subr.mxu0 0.0
    %443 = vmatpush1.msra.mxu0 0.0
    %444 = vmatprep.subr.mxu0 0.0
    %445 = vmatpush1.msra.mxu0 0.0
    %446 = vmatprep.subr.mxu0 0.0
    %447 = vmatpush1.msra.mxu0 0.0
    %448 = vmatprep.subr.mxu0 0.0
    %449 = vmatpush1.msra.mxu0 0.0
    %450 = vmatprep.subr.mxu0 0.0
    %451 = vmatpush1.msra.mxu0 0.0
    %452 = vmatprep.subr.mxu0 0.0
    %453 = vmatpush1.msra.mxu0 0.0
    %454 = vmatprep.mubr.f32.mxu0 0.0
    %455 = vmatmul.mubr.f32.gmra.mrb[0].mxu0 %v379
    %v456 = vpop.f32.mrb[0].mxu0
    %v457 = vadd.f32 %v360, %v456
    %v458 = vpop.f32.mrb[0].mxu0
    %459 = vmatprep.mubr.f32.mxu0 0.0
    %460 = vmatmul.mubr.f32.gmra.mrb[0].mxu0 %v382
    %v461 = vpop.f32.mrb[0].mxu0
    %v462 = vadd.f32 %v365, %v461
    %v463 = vpop.f32.mrb[0].mxu0
    %464 = vmatprep.mubr.f32.mxu0 0.0
    %465 = vmatmul.mubr.f32.gmra.mrb[0].mxu0 %v385
    %v466 = vpop.f32.mrb[0].mxu0
    %v467 = vadd.f32 %v370, %v466
    %v468 = vpop.f32.mrb[0].mxu0
    %469 = vmatprep.mubr.f32.mxu0 0.0
    %470 = vmatmul.mubr.f32.gmra.mrb[0].mxu0 %v388
    %v471 = vpop.f32.mrb[0].mxu0
    %v472 = vadd.f32 %v375, %v471
    %v473 = vpop.f32.mrb[0].mxu0
    %474 = vdwg.mxu0
    %v475 = vmax.f32 %v457, 0.0
    %v476 = vmax.f32 %v462, 0.0
    %v477 = vmax.f32 %v467, 0.0
    %v478 = vmax.f32 %v472, 0.0
    %v479 = vadd.f32 %v475, %v476
    %v480 = vadd.f32 %v479, %v477
    %v481 = vadd.f32 %v480, %v478
    %v482 = vrot.slane %v481, 4
    %v483 = vadd.f32 %v481, %v482
    %v484 = vrot.slane %v483, 2
    %v485 = vadd.f32 %v483, %v484
    %v486 = vrot.slane %v485, 1
    %v487 = vadd.f32 %v485, %v486
    %v488 = vadd.f32 %v198, %v487
    %v489 = vxor.u32 %v488, 2147483648
    %v490 = vmul.f32 %v489, 1.442695
    %v491 = vpow.pop %v490
    %v492 = vadd.f32 %v491, 1.0
    %v493 = vrcp.pop %v492
    %v494 = vmul.f32 1.0, %v493
    %495 = vst [vmem:[#allocation3 + $0x1] sm:$0x1] %v494
    // Predicated region
    $region34: #{tpu_custom_call.1} parent=1 // pred_check
      _
    $region35: #{tpu_custom_call.1} parent=1 // pred_check_branch
      %497 = sbr.rel (0) target = $region37
    $region36: #{tpu_custom_call.1} parent=1 // pred_region
      %s499 = ssub.s32 32, 32
      %500 = vsyncadd [#allocation4], %s499
      %s502 = sshll.u32 [#allocation3], 4
      %s503 = int_to_ptr.vmem [resolvable:$true] %s502
      %505 = dma.vmem_to_hbm [thread:$0]  %s503, 32, %s8, [#allocation4]
    $region37: #{tpu_custom_call.1} parent=1 // pred_fallthru
      _
    // Predicated region
    $region38: #{tpu_custom_call.1} parent=1 // pred_check
      _
    $region39: #{tpu_custom_call.1} parent=1 // pred_check_branch
      %507 = sbr.rel (0) target = $region41
    $region40: #{tpu_custom_call.1} parent=1 // pred_region
      %508 = dma.done [#allocation4], 32
    $region41: #{tpu_custom_call.1} parent=1 // pred_fallthru
      _
    %509 = vsyncpa [#allocation4], 1

</llo_original>
